<compile_context>
chip_gen: v5e
topology: v5e:2x2
jax: 0.10.0
libtpu: 0.0.40
codegen_flags: <defaults>
</compile_context>

<pallas_src>
import jax
import jax.numpy as jnp
from jax.experimental import pallas as pl
from jax.experimental.pallas import tpu as pltpu


def _ae_loss_kernel(p2_ref, p0_ref, t0_ref, acc_ref):
    """p2/p0/t0 blocks: (n_blk, h_blk, W); acc: resident (h_blk, W) f32 output."""
    # Zero the resident accumulator on the very first grid step.
    @pl.when((pl.program_id(0) == 0) & (pl.program_id(1) == 0))
    def _():
        acc_ref[...] = jnp.zeros_like(acc_ref)

    # Upcast on-chip; inputs stream in their native dtype.
    p2 = p2_ref[...].astype(jnp.float32)
    p0 = p0_ref[...].astype(jnp.float32)
    t0 = t0_ref[...].astype(jnp.float32)

    term1 = jnp.abs(jnp.exp(p2) - t0)
    term2 = jnp.abs((1.0 - jnp.exp(p0)) - t0)
    # Reduce only over the leading batch-block axis (elementwise vreg adds);
    # keep per-(sublane, lane) partial sums resident in VMEM.
    acc_ref[...] += jnp.sum(term1 + term2, axis=0)


def _largest_dividing_tile(dim, unit, max_elems):
    """Largest multiple of `unit` that divides `dim` and is <= max_elems.

    Falls back to the full extent (always a legal Mosaic block) if none.
    """
    best = None
    t = unit
    limit = min(dim, max_elems)
    while t <= limit:
        if dim % t == 0:
            best = t
        t += unit
    return best if best is not None else dim


def autoencoder_loss(prediction, target, *, target_block_bytes=2 << 20):
    """prediction: (N, C>=3, H, W), target: (N, Ct>=1, H, W). Returns scalar f32."""
    assert prediction.shape[0] == target.shape[0]
    assert prediction.ndim == target.ndim, (
        f"target.shape: {target.shape}, prediction.shape: {prediction.shape}."
    )
    N, C, H, W = prediction.shape
    assert C >= 3 and target.shape[1] >= 1
    assert target.shape[2:] == (H, W)

    itemsize = max(prediction.dtype.itemsize, target.dtype.itemsize)

    # Sublane (H) tile: multiple of 8 that divides H and keeps one (h_blk, W)
    # slab within the per-input block budget; otherwise the full extent.
    max_h = max(8, target_block_bytes // max(1, W * itemsize))
    h_blk = _largest_dividing_tile(H, 8, max_h)
    # Batch tile: largest divisor of N that keeps the block under budget.
    max_n = max(1, target_block_bytes // max(1, h_blk * W * itemsize))
    n_blk = _largest_dividing_tile(N, 1, max_n)

    grid = (N // n_blk, H // h_blk)

    def pred_spec(channel):
        # Squeezed channel dim (block size 1) pinned by the index_map.
        return pl.BlockSpec(
            (n_blk, None, h_blk, W), lambda n, h, c=channel: (n, c, h, 0)
        )

    tgt_spec = pl.BlockSpec((n_blk, None, h_blk, W), lambda n, h: (n, 0, h, 0))

    partial = pl.pallas_call(
        _ae_loss_kernel,
        out_shape=jax.ShapeDtypeStruct((h_blk, W), jnp.float32),
        grid=grid,
        in_specs=[pred_spec(2), pred_spec(0), tgt_spec],
        # Same output block for every step => VMEM-resident accumulator.
        out_specs=pl.BlockSpec((h_blk, W), lambda n, h: (0, 0)),
        compiler_params=pltpu.CompilerParams(
            dimension_semantics=("arbitrary", "arbitrary"),
            vmem_limit_bytes=32 << 20,
        ),
    )(prediction, prediction, target)

    # Both L1 means share the same denominator N*H*W, so sum/count is exact.
    # The final cross-lane reduce is over a single small (h_blk, W) f32 slab.
    # Note: on v7x one could shard the batch axis across the 2 TensorCores
    # with per-core partial-sum outputs for ~2x; kept single-core here for
    # portability/correctness across v5e/v6e/v7x.
    inv_count = jnp.float32(1.0 / (N * H * W))
    return jnp.sum(partial) * inv_count


def _reference_loss(prediction, target):
    pred_exp = jnp.exp(prediction.astype(jnp.float32))
    t0 = target[:, 0].astype(jnp.float32)
    return jnp.mean(jnp.abs(pred_exp[:, 2] - t0)) + jnp.mean(
        jnp.abs((1.0 - pred_exp[:, 0]) - t0)
    )


if __name__ == "__main__":
    key = jax.random.PRNGKey(0)
    k1, k2 = jax.random.split(key)
    # Small shapes consistent with the module: NCHW prediction with >=3 channels.
    prediction = jax.random.normal(k1, (2, 4, 16, 16), dtype=jnp.float32) * 0.1
    target = jax.random.uniform(k2, (2, 1, 16, 16), dtype=jnp.float32)

    loss = jax.block_until_ready(autoencoder_loss(prediction, target))
    ref = jax.block_until_ready(_reference_loss(prediction, target))
    assert jnp.allclose(loss, ref, rtol=1e-5, atol=1e-5), (loss, ref)
    print("KERNEL_OK")
</pallas_src>

<mosaic_0001>
module attributes {stable_mosaic.version = 11 : i64} {
  func.func @_ae_loss_kernel(%arg0: i32, %arg1: i32, %arg2: memref<2x1x16x16xf32, #tpu.memory_space<vmem>>, %arg3: memref<2x1x16x16xf32, #tpu.memory_space<vmem>>, %arg4: memref<2x1x16x16xf32, #tpu.memory_space<vmem>>, %arg5: memref<16x16xf32, #tpu.memory_space<vmem>>) attributes {dimension_semantics = [#tpu.dimension_semantics<arbitrary>, #tpu.dimension_semantics<arbitrary>], iteration_bounds = array<i64: 1, 1>, scalar_prefetch = 0 : i64, scratch_operands = 0 : i64, tpu.core_type = #tpu.core_type<tc>, window_params = [{transform_indices = @transform_0, window_bounds = array<i64: 2, 1, 16, 16>}, {transform_indices = @transform_1, window_bounds = array<i64: 2, 1, 16, 16>}, {transform_indices = @transform_2, window_bounds = array<i64: 2, 1, 16, 16>}, {pipeline_mode = #tpu.pipeline_mode<synchronous>, transform_indices = @transform_3, window_bounds = array<i64: 16, 16>}]} {
    %c0_i32 = arith.constant 0 : i32
    %0 = arith.cmpi eq, %arg0, %c0_i32 : i32
    %c0_i32_0 = arith.constant 0 : i32
    %1 = arith.cmpi eq, %arg1, %c0_i32_0 : i32
    %2 = arith.andi %0, %1 : i1
    %3 = arith.extui %2 : i1 to i32
    %c0_i32_1 = arith.constant 0 : i32
    %4 = arith.cmpi ne, %3, %c0_i32_1 : i32
    scf.if %4 {
      %cst_18 = arith.constant 0.000000e+00 : f32
      %24 = vector.broadcast %cst_18 : f32 to vector<16x16xf32>
      %c0_19 = arith.constant 0 : index
      %c0_20 = arith.constant 0 : index
      %25 = vector.load %arg5[%c0_19, %c0_20] : memref<16x16xf32, #tpu.memory_space<vmem>>, vector<16x16xf32>
      tpu.vector_store %arg5[%c0_19, %c0_20], %24 {strides = array<i32>} : memref<16x16xf32, #tpu.memory_space<vmem>>, vector<16x16xf32>,
    } else {
    }
    %c0 = arith.constant 0 : index
    %c0_2 = arith.constant 0 : index
    %c0_3 = arith.constant 0 : index
    %c0_4 = arith.constant 0 : index
    %5 = vector.load %arg2[%c0, %c0_2, %c0_3, %c0_4] : memref<2x1x16x16xf32, #tpu.memory_space<vmem>>, vector<2x1x16x16xf32>
    %6 = vector.shape_cast %5 : vector<2x1x16x16xf32> to vector<2x16x16xf32>
    %c0_5 = arith.constant 0 : index
    %c0_6 = arith.constant 0 : index
    %c0_7 = arith.constant 0 : index
    %c0_8 = arith.constant 0 : index
    %7 = vector.load %arg3[%c0_5, %c0_6, %c0_7, %c0_8] : memref<2x1x16x16xf32, #tpu.memory_space<vmem>>, vector<2x1x16x16xf32>
    %8 = vector.shape_cast %7 : vector<2x1x16x16xf32> to vector<2x16x16xf32>
    %c0_9 = arith.constant 0 : index
    %c0_10 = arith.constant 0 : index
    %c0_11 = arith.constant 0 : index
    %c0_12 = arith.constant 0 : index
    %9 = vector.load %arg4[%c0_9, %c0_10, %c0_11, %c0_12] : memref<2x1x16x16xf32, #tpu.memory_space<vmem>>, vector<2x1x16x16xf32>
    %10 = vector.shape_cast %9 : vector<2x1x16x16xf32> to vector<2x16x16xf32>
    %11 = math.exp %6 : vector<2x16x16xf32>
    %12 = arith.subf %11, %10 : vector<2x16x16xf32>
    %13 = math.absf %12 : vector<2x16x16xf32>
    %14 = math.exp %8 : vector<2x16x16xf32>
    %cst = arith.constant 1.000000e+00 : f32
    %15 = vector.broadcast %cst : f32 to vector<2x16x16xf32>
    %16 = arith.subf %15, %14 : vector<2x16x16xf32>
    %17 = arith.subf %16, %10 : vector<2x16x16xf32>
    %18 = math.absf %17 : vector<2x16x16xf32>
    %c0_13 = arith.constant 0 : index
    %c0_14 = arith.constant 0 : index
    %19 = vector.load %arg5[%c0_13, %c0_14] : memref<16x16xf32, #tpu.memory_space<vmem>>, vector<16x16xf32>
    %20 = arith.addf %13, %18 : vector<2x16x16xf32>
    %cst_15 = arith.constant dense<0.000000e+00> : vector<16x16xf32>
    %21 = vector.multi_reduction <add>, %20, %cst_15 [0] : vector<2x16x16xf32> to vector<16x16xf32>
    %22 = arith.addf %19, %21 : vector<16x16xf32>
    %c0_16 = arith.constant 0 : index
    %c0_17 = arith.constant 0 : index
    %23 = vector.load %arg5[%c0_16, %c0_17] : memref<16x16xf32, #tpu.memory_space<vmem>>, vector<16x16xf32>
    tpu.vector_store %arg5[%c0_16, %c0_17], %22 {strides = array<i32>} : memref<16x16xf32, #tpu.memory_space<vmem>>, vector<16x16xf32>,
    return
  }
  func.func @transform_0(%arg0: i32, %arg1: i32) -> (i32, i32, i32, i32) {
    %c2_i32 = arith.constant 2 : i32
    %c0_i32 = arith.constant 0 : i32
    %c0_i32_0 = arith.constant 0 : i32
    return %arg0, %c2_i32, %arg1, %c0_i32 : i32, i32, i32, i32
  }
  func.func @transform_1(%arg0: i32, %arg1: i32) -> (i32, i32, i32, i32) {
    %c0_i32 = arith.constant 0 : i32
    %c0_i32_0 = arith.constant 0 : i32
    %c0_i32_1 = arith.constant 0 : i32
    return %arg0, %c0_i32, %arg1, %c0_i32_0 : i32, i32, i32, i32
  }
  func.func @transform_2(%arg0: i32, %arg1: i32) -> (i32, i32, i32, i32) {
    %c0_i32 = arith.constant 0 : i32
    %c0_i32_0 = arith.constant 0 : i32
    %c0_i32_1 = arith.constant 0 : i32
    return %arg0, %c0_i32, %arg1, %c0_i32_0 : i32, i32, i32, i32
  }
  func.func @transform_3(%arg0: i32, %arg1: i32) -> (i32, i32) {
    %c0_i32 = arith.constant 0 : i32
    %c0_i32_0 = arith.constant 0 : i32
    %c0_i32_1 = arith.constant 0 : i32
    return %c0_i32, %c0_i32_0 : i32, i32
  }
}

</mosaic_0001>

<llo_original>
// kernel: tpu_custom_call.1
$region0: #{tpu_custom_call.1}
  #allocation0 [shape = 'u32[]', space=smem, size = 0x4, offset = 0x4, fixed_abs, tag = 'smem constant byte address 0x4 - core index']
  #allocation1 [shape = 'u32[72,128]{1,0:T(1,128)}', space=vmem, size = 0x9000, scoped, tag = 'internal scratch']
  #allocation9 [shape = 's32[]', space=sflag, size = 0x4, offset = 0, fixed_abs, tag = 'sflag constant byte address 0x0 - dummy sync flag']
  #allocation11 [shape = 's32[]', space=sflag, size = 0x4, offset = 0, fixed_abs, tag = 'sflag constant byte address 0x0 - dummy sync flag']
  %s0 = inlined_call_operand.hbm [shape: f32[2,4,16,16], index: 0, kind: input, shape index: {}]
  %s1 = inlined_call_operand.hbm [shape: f32[2,4,16,16], index: 1, kind: input, shape index: {}]
  %s2 = inlined_call_operand.hbm [shape: f32[2,1,16,16], index: 2, kind: input, shape index: {}]
  %s3 = inlined_call_operand.hbm [shape: f32[16,16], index: 3, kind: output, shape index: {}]
  %s4 = sld [smem:[#allocation0]]
  $region38: #{tpu_custom_call.1} parent=0
    _
  %s6 = ssub.s32 1, %s4
  %s7 = scalar_select 0, %s6, %s4
  $region1: #{tpu_custom_call.1} parent=0
    #allocation2 [shape = 'u8[16384]{0}', space=vmem, size = 0x4000, scoped, tag = 'input window, operand 0, single buffered']
    #allocation3 [shape = 's32[1]{0}', space=sflag, size = 0x4, scoped, tag = 'scoped memory for tpu_custom_call.1']
    #allocation4 [shape = 's32[1]{0}', space=sflag, size = 0x4, scoped, tag = 'scoped memory for tpu_custom_call.1']
    #allocation5 [shape = 'u8[16384]{0}', space=vmem, size = 0x4000, scoped, tag = 'input window, operand 1, single buffered']
    #allocation6 [shape = 's32[1]{0}', space=sflag, size = 0x4, scoped, tag = 'scoped memory for tpu_custom_call.1']
    #allocation7 [shape = 'u8[16384]{0}', space=vmem, size = 0x4000, scoped, tag = 'input window, operand 2, single buffered']
    #allocation8 [shape = 'u8[8192]{0}', space=vmem, size = 0x2000, scoped, tag = 'output window, operand 0, single buffered']
    %8 = vsyncpa [#allocation3], 0
    %9 = vsyncpa [#allocation6], 0
    %10 = vsyncpa [#allocation4], 0
    // Predicated region
    $region2: #{tpu_custom_call.1} parent=1 // pred_check
      _
    $region3: #{tpu_custom_call.1} parent=1 // pred_check_branch
      %12 = sbr.rel (0) target = $region5
    $region4: #{tpu_custom_call.1} parent=1 // pred_region
      #allocation10 [shape = 'u32[6]{0}', space=smem, size = 0x18, scoped, tag = 'DMA stride descriptor']
      %14 = vsyncadd [#allocation3], 0
      %s15 = scalar_lea.hbm %s0, 32
      %s17 = sshll.u32 1, 14
      %s18 = sxor.u32 4294967295, %s17
      %s20 = sld [smem:[#allocation0]]
      %s21 = sadd.s32 2, %s20
      %s23 = sshll.u32 7, 26
      %s24 = sxor.u32 4294967295, %s23
      %s25 = sand.u32 0, %s24
      %s26 = sshll.u32 %s21, 26
      %s27 = sor.u32 %s25, %s26
      %s28 = sshll.u32 %s15, 4
      %s29 = int_to_ptr.hbm [resolvable:$true] %s28
      %s30 = sshll.u32 [#allocation2], 4
      %s31 = int_to_ptr.vmem [resolvable:$true] %s30
      %37 = sst [smem:[#allocation10]] 1024
      %s38 = scalar_lea.smem [#allocation10], 1
      %39 = sst [smem:[%s38]] 256
      %s40 = scalar_lea.smem [#allocation10], 2
      %41 = sst [smem:[%s40]] 2
      %s42 = scalar_lea.smem [#allocation10], 3
      %43 = sst [smem:[%s42]] 128
      %s44 = scalar_lea.smem [#allocation10], 4
      %45 = sst [smem:[%s44]] 128
      %s46 = scalar_lea.smem [#allocation10], 5
      %47 = sst [smem:[%s46]] 8
      %49 = dma.general %s29, 512, %s31, [#allocation3], [#allocation9], [#allocation10], %s27, 0
    $region5: #{tpu_custom_call.1} parent=1 // pred_fallthru
      _
    // Predicated region
    $region6: #{tpu_custom_call.1} parent=1 // pred_check
      _
    $region7: #{tpu_custom_call.1} parent=1 // pred_check_branch
      %51 = sbr.rel (0) target = $region9
    $region8: #{tpu_custom_call.1} parent=1 // pred_region
      #allocation12 [shape = 'u32[6]{0}', space=smem, size = 0x18, scoped, tag = 'DMA stride descriptor']
      %53 = vsyncadd [#allocation6], 0
      %s55 = sshll.u32 1, 14
      %s56 = sxor.u32 4294967295, %s55
      %s58 = sld [smem:[#allocation0]]
      %s59 = sadd.s32 2, %s58
      %s61 = sshll.u32 7, 26
      %s62 = sxor.u32 4294967295, %s61
      %s63 = sand.u32 0, %s62
      %s64 = sshll.u32 %s59, 26
      %s65 = sor.u32 %s63, %s64
      %s66 = sshll.u32 %s1, 4
      %s67 = int_to_ptr.hbm [resolvable:$true] %s66
      %s68 = sshll.u32 [#allocation5], 4
      %s69 = int_to_ptr.vmem [resolvable:$true] %s68
      %75 = sst [smem:[#allocation12]] 1024
      %s76 = scalar_lea.smem [#allocation12], 1
      %77 = sst [smem:[%s76]] 256
      %s78 = scalar_lea.smem [#allocation12], 2
      %79 = sst [smem:[%s78]] 2
      %s80 = scalar_lea.smem [#allocation12], 3
      %81 = sst [smem:[%s80]] 128
      %s82 = scalar_lea.smem [#allocation12], 4
      %83 = sst [smem:[%s82]] 128
      %s84 = scalar_lea.smem [#allocation12], 5
      %85 = sst [smem:[%s84]] 8
      %87 = dma.general %s67, 512, %s69, [#allocation6], [#allocation11], [#allocation12], %s65, 0
    $region9: #{tpu_custom_call.1} parent=1 // pred_fallthru
      _
    // Predicated region
    $region10: #{tpu_custom_call.1} parent=1 // pred_check
      _
    $region11: #{tpu_custom_call.1} parent=1 // pred_check_branch
      %89 = sbr.rel (0) target = $region13
    $region12: #{tpu_custom_call.1} parent=1 // pred_region
      %91 = vsyncadd [#allocation6], 0
      %s92 = sshll.u32 %s2, 4
      %s93 = int_to_ptr.hbm [resolvable:$true] %s92
      %s94 = sshll.u32 [#allocation7], 4
      %s95 = int_to_ptr.vmem [resolvable:$true] %s94
      %100 = dma.hbm_to_vmem [thread:$0]  %s93, 512, %s95, [#allocation6], 128, 128, 8
    $region13: #{tpu_custom_call.1} parent=1 // pred_fallthru
      _
    // Predicated region
    $region14: #{tpu_custom_call.1} parent=1 // pred_check
      _
    $region15: #{tpu_custom_call.1} parent=1 // pred_check_branch
      %102 = sbr.rel (0) target = $region17
    $region16: #{tpu_custom_call.1} parent=1 // pred_region
      %104 = dma.done [#allocation3], 512
    $region17: #{tpu_custom_call.1} parent=1 // pred_fallthru
      _
    // Predicated region
    $region18: #{tpu_custom_call.1} parent=1 // pred_check
      _
    $region19: #{tpu_custom_call.1} parent=1 // pred_check_branch
      %106 = sbr.rel (0) target = $region21
    $region20: #{tpu_custom_call.1} parent=1 // pred_region
      %108 = dma.done [#allocation6], 512
    $region21: #{tpu_custom_call.1} parent=1 // pred_fallthru
      _
    // Predicated region
    $region22: #{tpu_custom_call.1} parent=1 // pred_check
      _
    $region23: #{tpu_custom_call.1} parent=1 // pred_check_branch
      %110 = sbr.rel (0) target = $region25
    $region24: #{tpu_custom_call.1} parent=1 // pred_region
      %112 = dma.done [#allocation6], 512
    $region25: #{tpu_custom_call.1} parent=1 // pred_fallthru
      _
    %p113 = scmp.eq.s32.totalorder 0, 0
    %p114 = scmp.eq.s32.totalorder 0, 0
    %p115 = pnand %p113, %p114
    %p116 = pneg %p115
    // Predicated region
    $region26: #{tpu_custom_call.1} parent=1 // pred_check
      _
    $region27: #{tpu_custom_call.1} parent=1 // pred_check_branch
      %118 = sbr.rel (%p115) target = $region29
    $region28: #{tpu_custom_call.1} parent=1 // pred_region
      %vm119 = vcmask 130048
      %120 = vst.msk [vmem:[#allocation8] sm:$0xff] %vm119, 0.0
      %121 = vst.msk [vmem:[#allocation8 + $0x8] sm:$0xff] %vm119, 0.0
    $region29: #{tpu_custom_call.1} parent=1 // pred_fallthru
      _
    %v122 = vld [vmem:[#allocation2] sm:$0xff]
    %v123 = vld [vmem:[#allocation2 + $0x8] sm:$0xff]
    %v124 = vld [vmem:[#allocation2 + $0x10] sm:$0xff]
    %v125 = vld [vmem:[#allocation2 + $0x18] sm:$0xff]
    %v126 = vld [vmem:[#allocation5] sm:$0xff]
    %v127 = vld [vmem:[#allocation5 + $0x8] sm:$0xff]
    %v128 = vld [vmem:[#allocation5 + $0x10] sm:$0xff]
    %v129 = vld [vmem:[#allocation5 + $0x18] sm:$0xff]
    %v130 = vld [vmem:[#allocation7] sm:$0xff]
    %v131 = vld [vmem:[#allocation7 + $0x8] sm:$0xff]
    %v132 = vld [vmem:[#allocation7 + $0x10] sm:$0xff]
    %v133 = vld [vmem:[#allocation7 + $0x18] sm:$0xff]
    %v134 = vmul.f32 %v122, 1.442695
    %v135 = vpow.pop %v134
    %v136 = vmul.f32 %v123, 1.442695
    %v137 = vpow.pop %v136
    %v138 = vmul.f32 %v124, 1.442695
    %v139 = vpow.pop %v138
    %v140 = vmul.f32 %v125, 1.442695
    %v141 = vpow.pop %v140
    %v142 = vsub.f32 %v135, %v130
    %v143 = vsub.f32 %v137, %v131
    %v144 = vsub.f32 %v139, %v132
    %v145 = vsub.f32 %v141, %v133
    %v146 = vand.u32 2147483647, %v142
    %v147 = vand.u32 2147483647, %v143
    %v148 = vand.u32 2147483647, %v144
    %v149 = vand.u32 2147483647, %v145
    %v150 = vmul.f32 %v126, 1.442695
    %v151 = vpow.pop %v150
    %v152 = vmul.f32 %v127, 1.442695
    %v153 = vpow.pop %v152
    %v154 = vmul.f32 %v128, 1.442695
    %v155 = vpow.pop %v154
    %v156 = vmul.f32 %v129, 1.442695
    %v157 = vpow.pop %v156
    %v158 = vsub.f32 1.0, %v151
    %v159 = vsub.f32 1.0, %v153
    %v160 = vsub.f32 1.0, %v155
    %v161 = vsub.f32 1.0, %v157
    %v162 = vsub.f32 %v158, %v130
    %v163 = vsub.f32 %v159, %v131
    %v164 = vsub.f32 %v160, %v132
    %v165 = vsub.f32 %v161, %v133
    %v166 = vand.u32 2147483647, %v162
    %v167 = vand.u32 2147483647, %v163
    %v168 = vand.u32 2147483647, %v164
    %v169 = vand.u32 2147483647, %v165
    %v170 = vld [vmem:[#allocation8] sm:$0xff]
    %v171 = vld [vmem:[#allocation8 + $0x8] sm:$0xff]
    %v172 = vadd.f32 %v146, %v166
    %v173 = vadd.f32 %v147, %v167
    %v174 = vadd.f32 %v148, %v168
    %v175 = vadd.f32 %v149, %v169
    %vm176 = vcmask 130048
    %v177 = vsel %vm176, %v172, 0.0
    %v178 = vsel %vm176, %v174, 0.0
    %v179 = vadd.f32 %v177, %v178
    %v180 = vsel %vm176, %v173, 0.0
    %v181 = vsel %vm176, %v175, 0.0
    %v182 = vadd.f32 %v180, %v181
    %v183 = vadd.f32 %v170, %v179
    %v184 = vadd.f32 %v171, %v182
    %185 = vst.msk [vmem:[#allocation8] sm:$0xff] %vm176, %v183
    %186 = vst.msk [vmem:[#allocation8 + $0x8] sm:$0xff] %vm176, %v184
    // Predicated region
    $region30: #{tpu_custom_call.1} parent=1 // pred_check
      _
    $region31: #{tpu_custom_call.1} parent=1 // pred_check_branch
      %188 = sbr.rel (0) target = $region33
    $region32: #{tpu_custom_call.1} parent=1 // pred_region
      %190 = vsyncadd [#allocation4], 0
      %s191 = sshll.u32 [#allocation8], 4
      %s192 = int_to_ptr.vmem [resolvable:$true] %s191
      %s193 = sshll.u32 %s3, 4
      %s194 = int_to_ptr.hbm [resolvable:$true] %s193
      %199 = dma.vmem_to_hbm [thread:$0]  %s192, 256, %s194, [#allocation4], 128, 128, 8
    $region33: #{tpu_custom_call.1} parent=1 // pred_fallthru
      _
    // Predicated region
    $region34: #{tpu_custom_call.1} parent=1 // pred_check
      _
    $region35: #{tpu_custom_call.1} parent=1 // pred_check_branch
      %201 = sbr.rel (0) target = $region37
    $region36: #{tpu_custom_call.1} parent=1 // pred_region
      %203 = dma.done [#allocation4], 256
    $region37: #{tpu_custom_call.1} parent=1 // pred_fallthru
      _
    %204 = vsyncpa [#allocation3], 1
    %205 = vsyncpa [#allocation6], 1
    %206 = vsyncpa [#allocation4], 1

</llo_original>
